<compile_context>
chip_gen: v7x
topology: tpu7x:2x2x1
jax: 0.10.0
libtpu: 0.0.40
codegen_flags: <defaults>
</compile_context>

<pallas_src>
import math
import jax
import jax.numpy as jnp
from jax.experimental import pallas as pl
from jax.experimental.pallas import tpu as pltpu

ALPHA = 0.2            # LeakyReLU negative slope
NEG_BIG = -9e15        # mask value used by the reference implementation
LANE = 128             # TPU lane width


def attn_gcn_kernel(x_ref, w_ref, a1_ref, a2_ref, adj_ref, out_ref):
    # Per grid step (bt graphs):
    #   x_ref   : (bt, N, Fin)   f32
    #   w_ref   : (Fin, Fpad)    f32   (resident: constant index_map)
    #   a1_ref  : (1, Fpad)      f32   (resident)
    #   a2_ref  : (1, Fpad)      f32   (resident)
    #   adj_ref : (bt, N, N)     int8
    #   out_ref : (bt, N, Fpad)  f32   (lane-dense: Fpad % 128 == 0)
    bt = x_ref.shape[0]
    w = w_ref[...]
    a1 = a1_ref[...]
    a2 = a2_ref[...]

    # Static unroll over the graphs in this batch tile: keeps every op 2-D and amortizes
    # the per-grid-step overhead across bt graphs.
    for g in range(bt):
        x = x_ref[g]                                                      # (N, Fin)

        # h = x @ W  (zero-padded feature columns stay zero through the whole kernel)
        h = jnp.dot(x, w, preferred_element_type=jnp.float32)             # (N, Fpad)

        # attention logits: e[i, j] = LeakyReLU( (h @ a1)[i] + (h @ a2)[j] )
        #  - wh1: VPU multiply + cross-lane reduce, node index stays on sublanes -> (N, 1)
        #  - wh2: one contraction that directly yields the lane-oriented row -> (1, N)
        #         (avoids an explicit cross-lane transpose)
        wh1 = jnp.sum(h * a1, axis=-1, keepdims=True)                      # (N, 1)
        wh2 = jax.lax.dot_general(a2, h, (((1,), (1,)), ((), ())),
                                  preferred_element_type=jnp.float32)      # (1, N)
        e = wh1 + wh2                                                      # (N, N)
        e = jnp.where(e > 0, e, ALPHA * e)                                 # LeakyReLU

        # adjacency mask (int8 stream) + row softmax, matching torch.where(adj>0, e, -9e15)
        # exactly (all-masked rows -> uniform attention, like the reference).
        mask = adj_ref[g].astype(jnp.float32) > 0.0                        # (N, N) bool
        masked = jnp.where(mask, e, jnp.float32(NEG_BIG))
        m = jnp.max(masked, axis=1, keepdims=True)                         # (N, 1)
        p = jnp.exp(masked - m)                                            # unnormalized attn
        denom = jnp.sum(p, axis=1, keepdims=True)                          # (N, 1)

        # TODO(synk): F.dropout(attention, p=0.3, training=True) omitted -- this is the
        # deterministic (eval-mode) forward; add pltpu.prng_seed/prng_random_bits dropout
        # on `p` if training parity is required.

        # h' = (p @ h) * (1/denom): normalization deferred past the matmul; approx
        # reciprocal lands on the EUP slot + one VPU multiply instead of an exact divide
        # over the N*N score matrix.
        h_un = jnp.dot(p, h, preferred_element_type=jnp.float32)           # (N, Fpad)
        h_prime = h_un * pl.reciprocal(denom, approx=True)

        # ELU activation (padded columns are 0 -> ELU(0) = 0, so padding stays clean)
        out = jnp.where(h_prime > 0, h_prime, jnp.exp(h_prime) - 1.0)
        out_ref[g] = out.astype(out_ref.dtype)


def _pick_batch_tile(B, N, Fin, Fpad, vmem_budget=16 * 1024 * 1024):
    """Largest divisor of B that fits the VMEM budget, keeping >=2 grid steps for megacore."""
    per_graph = (2 * (N * Fin * 4 + N * N * 1 + N * Fpad * 4)   # double-buffered blocks
                 + 2 * N * Fpad * 4 + 3 * N * N * 4)            # h, h', e/masked/p
    cap = max(1, vmem_budget // max(per_graph, 1))
    if B >= 2:
        cap = min(cap, max(1, B // 2))   # keep at least 2 grid steps (v7x: 2 TCs)
    cap = min(cap, B)
    bt = 1
    for d in range(1, cap + 1):
        if B % d == 0:
            bt = d
    return bt


def attn_graph_convolution(x, adj, W, a, *, batch_tile=None):
    """AttnGraphConvolution forward (eval mode).

    x:   (B, N, Fin) or (N, Fin)  float
    adj: (B, N, N)   or (N, N)    any dtype (nonzero = edge)
    W:   (Fin, Fout) f32
    a:   (2*Fout, 1) f32
    returns (B, N, Fout) (or (N, Fout) if x was unbatched)
    """
    unbatched = (x.ndim == 2)
    if unbatched:
        x = x[None]
        adj = adj[None]

    B, N, Fin = x.shape
    Fout = W.shape[1]
    Fpad = max(LANE, pl.cdiv(Fout, LANE) * LANE)   # lane-dense padded feature width

    bt = batch_tile if batch_tile is not None else _pick_batch_tile(B, N, Fin, Fpad)
    assert B % bt == 0, f"batch tile {bt} must divide batch {B}"

    # Zero-pad the feature axis so every in-kernel store is a full 128-lane vst.
    W_pad = jnp.zeros((Fin, Fpad), jnp.float32).at[:, :Fout].set(W.astype(jnp.float32))
    a1 = jnp.zeros((1, Fpad), jnp.float32).at[0, :Fout].set(a[:Fout, 0].astype(jnp.float32))
    a2 = jnp.zeros((1, Fpad), jnp.float32).at[0, :Fout].set(a[Fout:, 0].astype(jnp.float32))

    x_f32 = x.astype(jnp.float32)
    adj_i8 = (adj > 0).astype(jnp.int8)            # int8 stream: 4x less HBM/DMA than f32

    out_padded = pl.pallas_call(
        attn_gcn_kernel,
        out_shape=jax.ShapeDtypeStruct((B, N, Fpad), jnp.float32),
        grid=(B // bt,),
        in_specs=[
            pl.BlockSpec((bt, N, Fin), lambda b: (b, 0, 0)),   # per-tile node features
            pl.BlockSpec((Fin, Fpad), lambda b: (0, 0)),       # shared weights (resident)
            pl.BlockSpec((1, Fpad), lambda b: (0, 0)),         # attention vec, first half
            pl.BlockSpec((1, Fpad), lambda b: (0, 0)),         # attention vec, second half
            pl.BlockSpec((bt, N, N), lambda b: (b, 0, 0)),     # per-tile adjacency (int8)
        ],
        out_specs=pl.BlockSpec((bt, N, Fpad), lambda b: (b, 0, 0)),
        compiler_params=pltpu.CompilerParams(
            dimension_semantics=("parallel",),                 # batch blocks are independent
            vmem_limit_bytes=32 * 1024 * 1024,
        ),
    )(x_f32, W_pad, a1, a2, adj_i8)

    out = out_padded[..., :Fout]
    return out[0] if unbatched else out


def reference(x, adj, W, a):
    """Plain-JAX reference matching the PyTorch forward (eval mode, no dropout), batched."""
    Fout = W.shape[1]
    h = jnp.einsum('bnf,fo->bno', x, W)
    wh1 = jnp.einsum('bno,o->bn', h, a[:Fout, 0])[..., None]    # (B, N, 1)
    wh2 = jnp.einsum('bno,o->bn', h, a[Fout:, 0])[:, None, :]   # (B, 1, N)
    e = wh1 + wh2
    e = jnp.where(e > 0, e, ALPHA * e)
    masked = jnp.where(adj > 0, e, jnp.full_like(e, NEG_BIG))
    attention = jax.nn.softmax(masked, axis=-1)
    h_prime = jnp.einsum('bnm,bmo->bno', attention, h)
    return jnp.where(h_prime > 0, h_prime, jnp.exp(h_prime) - 1.0)


def xavier_uniform(key, shape, gain=1.414):
    # PyTorch xavier_uniform_: fan_in = shape[1], fan_out = shape[0] for 2-D tensors.
    fan_in, fan_out = shape[1], shape[0]
    bound = gain * math.sqrt(6.0 / (fan_in + fan_out))
    return jax.random.uniform(key, shape, minval=-bound, maxval=bound, dtype=jnp.float32)


if __name__ == "__main__":
    key = jax.random.PRNGKey(0)
    k_x, k_adj, k_w, k_a = jax.random.split(key, 4)

    batch, num_nodes, in_features, out_features = 4, 16, 8, 16

    x = jax.random.normal(k_x, (batch, num_nodes, in_features), dtype=jnp.float32)
    adj_bool = jax.random.uniform(k_adj, (batch, num_nodes, num_nodes)) > 0.5
    eye = jnp.eye(num_nodes, dtype=bool)[None]
    adj = jnp.logical_or(adj_bool, eye).astype(jnp.int8)   # self-loops -> no empty rows

    W = xavier_uniform(k_w, (in_features, out_features))
    a = xavier_uniform(k_a, (2 * out_features, 1))

    out = attn_graph_convolution(x, adj, W, a)
    out = jax.block_until_ready(out)

    ref = reference(x, adj, W, a)
    assert out.shape == (batch, num_nodes, out_features)
    # Tolerance loosened vs pure-f32 because the kernel uses the EUP approximate reciprocal
    # for the deferred softmax normalization.
    assert jnp.allclose(out, ref, atol=1e-2, rtol=1e-2), "mismatch vs reference"

    print("KERNEL_OK")
</pallas_src>

<mosaic_0001>
module attributes {stable_mosaic.version = 11 : i64} {
  func.func @attn_gcn_kernel(%arg0: i32, %arg1: memref<2x16x8xf32, #tpu.memory_space<vmem>>, %arg2: memref<8x128xf32, #tpu.memory_space<vmem>>, %arg3: memref<1x128xf32, #tpu.memory_space<vmem>>, %arg4: memref<1x128xf32, #tpu.memory_space<vmem>>, %arg5: memref<2x16x16xi8, #tpu.memory_space<vmem>>, %arg6: memref<2x16x128xf32, #tpu.memory_space<vmem>>) attributes {dimension_semantics = [#tpu.dimension_semantics<parallel>], iteration_bounds = array<i64: 2>, scalar_prefetch = 0 : i64, scratch_operands = 0 : i64, tpu.core_type = #tpu.core_type<tc>, window_params = [{transform_indices = @transform_0, window_bounds = array<i64: 2, 16, 8>}, {pipeline_mode = #tpu.pipeline_mode<synchronous>, transform_indices = @transform_1, window_bounds = array<i64: 8, 128>}, {pipeline_mode = #tpu.pipeline_mode<synchronous>, transform_indices = @transform_2, window_bounds = array<i64: 1, 128>}, {pipeline_mode = #tpu.pipeline_mode<synchronous>, transform_indices = @transform_3, window_bounds = array<i64: 1, 128>}, {transform_indices = @transform_4, window_bounds = array<i64: 2, 16, 16>}, {transform_indices = @transform_5, window_bounds = array<i64: 2, 16, 128>}]} {
    %c0 = arith.constant 0 : index
    %c0_0 = arith.constant 0 : index
    %0 = vector.load %arg2[%c0, %c0_0] : memref<8x128xf32, #tpu.memory_space<vmem>>, vector<8x128xf32>
    %c0_1 = arith.constant 0 : index
    %c0_2 = arith.constant 0 : index
    %1 = vector.load %arg3[%c0_1, %c0_2] : memref<1x128xf32, #tpu.memory_space<vmem>>, vector<1x128xf32>
    %c0_3 = arith.constant 0 : index
    %c0_4 = arith.constant 0 : index
    %2 = vector.load %arg4[%c0_3, %c0_4] : memref<1x128xf32, #tpu.memory_space<vmem>>, vector<1x128xf32>
    %c0_5 = arith.constant 0 : index
    %c0_6 = arith.constant 0 : index
    %c0_7 = arith.constant 0 : index
    %3 = vector.load %arg1[%c0_5, %c0_6, %c0_7] : memref<2x16x8xf32, #tpu.memory_space<vmem>>, vector<1x16x8xf32>
    %4 = vector.shape_cast %3 : vector<1x16x8xf32> to vector<16x8xf32>
    %cst = arith.constant dense<0.000000e+00> : vector<16x128xf32>
    %5 = tpu.matmul %4, %0, %cst {dimension_numbers = #tpu.dot_dimension_numbers<[1], [0], [0], [1], [0, 0, 1, 1], [], []>} : vector<16x8xf32>, vector<8x128xf32>, vector<16x128xf32> -> vector<16x128xf32>
    %6 = vector.broadcast %1 : vector<1x128xf32> to vector<16x128xf32>
    %7 = arith.mulf %5, %6 : vector<16x128xf32>
    %cst_8 = arith.constant dense<0.000000e+00> : vector<16xf32>
    %8 = vector.multi_reduction <add>, %7, %cst_8 [1] : vector<16x128xf32> to vector<16xf32>
    %9 = vector.shape_cast %8 : vector<16xf32> to vector<16x1xf32>
    %cst_9 = arith.constant dense<0.000000e+00> : vector<1x16xf32>
    %10 = tpu.matmul %2, %5, %cst_9 {dimension_numbers = #tpu.dot_dimension_numbers<[1], [1], [0], [0], [0, 0, 1, 0], [], []>} : vector<1x128xf32>, vector<16x128xf32>, vector<1x16xf32> -> vector<1x16xf32>
    %11 = vector.broadcast %9 : vector<16x1xf32> to vector<16x16xf32>
    %12 = vector.broadcast %10 : vector<1x16xf32> to vector<16x16xf32>
    %13 = arith.addf %11, %12 : vector<16x16xf32>
    %cst_10 = arith.constant 0.000000e+00 : f32
    %14 = vector.broadcast %cst_10 : f32 to vector<16x16xf32>
    %15 = arith.cmpf ogt, %13, %14 : vector<16x16xf32>
    %cst_11 = arith.constant 2.000000e-01 : f32
    %16 = vector.broadcast %cst_11 : f32 to vector<16x16xf32>
    %17 = arith.mulf %16, %13 : vector<16x16xf32>
    %18 = arith.select %15, %13, %17 : vector<16x16xi1>, vector<16x16xf32>
    %c0_12 = arith.constant 0 : index
    %c0_13 = arith.constant 0 : index
    %c0_14 = arith.constant 0 : index
    %19 = vector.load %arg5[%c0_12, %c0_13, %c0_14] : memref<2x16x16xi8, #tpu.memory_space<vmem>>, vector<1x16x16xi8>
    %20 = vector.shape_cast %19 : vector<1x16x16xi8> to vector<16x16xi8>
    %21 = arith.sitofp %20 : vector<16x16xi8> to vector<16x16xf32>
    %cst_15 = arith.constant 0.000000e+00 : f32
    %22 = vector.broadcast %cst_15 : f32 to vector<16x16xf32>
    %23 = arith.cmpf ogt, %21, %22 : vector<16x16xf32>
    %cst_16 = arith.constant -9.000000e+15 : f32
    %24 = vector.broadcast %cst_16 : f32 to vector<16x16xf32>
    %25 = arith.select %23, %18, %24 : vector<16x16xi1>, vector<16x16xf32>
    %cst_17 = arith.constant dense<0xFF800000> : vector<16xf32>
    %26 = vector.multi_reduction <maximumf>, %25, %cst_17 [1] : vector<16x16xf32> to vector<16xf32>
    %27 = vector.shape_cast %26 : vector<16xf32> to vector<16x1xf32>
    %28 = vector.broadcast %27 : vector<16x1xf32> to vector<16x16xf32>
    %29 = arith.subf %25, %28 : vector<16x16xf32>
    %30 = math.exp %29 : vector<16x16xf32>
    %cst_18 = arith.constant dense<0.000000e+00> : vector<16xf32>
    %31 = vector.multi_reduction <add>, %30, %cst_18 [1] : vector<16x16xf32> to vector<16xf32>
    %32 = vector.shape_cast %31 : vector<16xf32> to vector<16x1xf32>
    %cst_19 = arith.constant dense<0.000000e+00> : vector<16x128xf32>
    %33 = tpu.matmul %30, %5, %cst_19 {dimension_numbers = #tpu.dot_dimension_numbers<[1], [0], [0], [1], [0, 0, 1, 1], [], []>} : vector<16x16xf32>, vector<16x128xf32>, vector<16x128xf32> -> vector<16x128xf32>
    %34 = tpu.reciprocal %32 {approx = true} : vector<16x1xf32> -> vector<16x1xf32>
    %35 = vector.broadcast %34 : vector<16x1xf32> to vector<16x128xf32>
    %36 = arith.mulf %33, %35 : vector<16x128xf32>
    %cst_20 = arith.constant 0.000000e+00 : f32
    %37 = vector.broadcast %cst_20 : f32 to vector<16x128xf32>
    %38 = arith.cmpf ogt, %36, %37 : vector<16x128xf32>
    %39 = math.exp %36 : vector<16x128xf32>
    %cst_21 = arith.constant 1.000000e+00 : f32
    %40 = vector.broadcast %cst_21 : f32 to vector<16x128xf32>
    %41 = arith.subf %39, %40 : vector<16x128xf32>
    %42 = arith.select %38, %36, %41 : vector<16x128xi1>, vector<16x128xf32>
    %c0_22 = arith.constant 0 : index
    %c0_23 = arith.constant 0 : index
    %c0_24 = arith.constant 0 : index
    %43 = vector.load %arg6[%c0_22, %c0_23, %c0_24] : memref<2x16x128xf32, #tpu.memory_space<vmem>>, vector<1x16x128xf32>
    %44 = vector.shape_cast %43 : vector<1x16x128xf32> to vector<16x128xf32>
    %45 = vector.shape_cast %42 : vector<16x128xf32> to vector<1x16x128xf32>
    tpu.vector_store %arg6[%c0_22, %c0_23, %c0_24], %45 {strides = array<i32>} : memref<2x16x128xf32, #tpu.memory_space<vmem>>, vector<1x16x128xf32>,
    %c1 = arith.constant 1 : index
    %c0_25 = arith.constant 0 : index
    %c0_26 = arith.constant 0 : index
    %46 = vector.load %arg1[%c1, %c0_25, %c0_26] : memref<2x16x8xf32, #tpu.memory_space<vmem>>, vector<1x16x8xf32>
    %47 = vector.shape_cast %46 : vector<1x16x8xf32> to vector<16x8xf32>
    %cst_27 = arith.constant dense<0.000000e+00> : vector<16x128xf32>
    %48 = tpu.matmul %47, %0, %cst_27 {dimension_numbers = #tpu.dot_dimension_numbers<[1], [0], [0], [1], [0, 0, 1, 1], [], []>} : vector<16x8xf32>, vector<8x128xf32>, vector<16x128xf32> -> vector<16x128xf32>
    %49 = vector.broadcast %1 : vector<1x128xf32> to vector<16x128xf32>
    %50 = arith.mulf %48, %49 : vector<16x128xf32>
    %cst_28 = arith.constant dense<0.000000e+00> : vector<16xf32>
    %51 = vector.multi_reduction <add>, %50, %cst_28 [1] : vector<16x128xf32> to vector<16xf32>
    %52 = vector.shape_cast %51 : vector<16xf32> to vector<16x1xf32>
    %cst_29 = arith.constant dense<0.000000e+00> : vector<1x16xf32>
    %53 = tpu.matmul %2, %48, %cst_29 {dimension_numbers = #tpu.dot_dimension_numbers<[1], [1], [0], [0], [0, 0, 1, 0], [], []>} : vector<1x128xf32>, vector<16x128xf32>, vector<1x16xf32> -> vector<1x16xf32>
    %54 = vector.broadcast %52 : vector<16x1xf32> to vector<16x16xf32>
    %55 = vector.broadcast %53 : vector<1x16xf32> to vector<16x16xf32>
    %56 = arith.addf %54, %55 : vector<16x16xf32>
    %cst_30 = arith.constant 0.000000e+00 : f32
    %57 = vector.broadcast %cst_30 : f32 to vector<16x16xf32>
    %58 = arith.cmpf ogt, %56, %57 : vector<16x16xf32>
    %cst_31 = arith.constant 2.000000e-01 : f32
    %59 = vector.broadcast %cst_31 : f32 to vector<16x16xf32>
    %60 = arith.mulf %59, %56 : vector<16x16xf32>
    %61 = arith.select %58, %56, %60 : vector<16x16xi1>, vector<16x16xf32>
    %c1_32 = arith.constant 1 : index
    %c0_33 = arith.constant 0 : index
    %c0_34 = arith.constant 0 : index
    %62 = vector.load %arg5[%c1_32, %c0_33, %c0_34] : memref<2x16x16xi8, #tpu.memory_space<vmem>>, vector<1x16x16xi8>
    %63 = vector.shape_cast %62 : vector<1x16x16xi8> to vector<16x16xi8>
    %64 = arith.sitofp %63 : vector<16x16xi8> to vector<16x16xf32>
    %cst_35 = arith.constant 0.000000e+00 : f32
    %65 = vector.broadcast %cst_35 : f32 to vector<16x16xf32>
    %66 = arith.cmpf ogt, %64, %65 : vector<16x16xf32>
    %cst_36 = arith.constant -9.000000e+15 : f32
    %67 = vector.broadcast %cst_36 : f32 to vector<16x16xf32>
    %68 = arith.select %66, %61, %67 : vector<16x16xi1>, vector<16x16xf32>
    %cst_37 = arith.constant dense<0xFF800000> : vector<16xf32>
    %69 = vector.multi_reduction <maximumf>, %68, %cst_37 [1] : vector<16x16xf32> to vector<16xf32>
    %70 = vector.shape_cast %69 : vector<16xf32> to vector<16x1xf32>
    %71 = vector.broadcast %70 : vector<16x1xf32> to vector<16x16xf32>
    %72 = arith.subf %68, %71 : vector<16x16xf32>
    %73 = math.exp %72 : vector<16x16xf32>
    %cst_38 = arith.constant dense<0.000000e+00> : vector<16xf32>
    %74 = vector.multi_reduction <add>, %73, %cst_38 [1] : vector<16x16xf32> to vector<16xf32>
    %75 = vector.shape_cast %74 : vector<16xf32> to vector<16x1xf32>
    %cst_39 = arith.constant dense<0.000000e+00> : vector<16x128xf32>
    %76 = tpu.matmul %73, %48, %cst_39 {dimension_numbers = #tpu.dot_dimension_numbers<[1], [0], [0], [1], [0, 0, 1, 1], [], []>} : vector<16x16xf32>, vector<16x128xf32>, vector<16x128xf32> -> vector<16x128xf32>
    %77 = tpu.reciprocal %75 {approx = true} : vector<16x1xf32> -> vector<16x1xf32>
    %78 = vector.broadcast %77 : vector<16x1xf32> to vector<16x128xf32>
    %79 = arith.mulf %76, %78 : vector<16x128xf32>
    %cst_40 = arith.constant 0.000000e+00 : f32
    %80 = vector.broadcast %cst_40 : f32 to vector<16x128xf32>
    %81 = arith.cmpf ogt, %79, %80 : vector<16x128xf32>
    %82 = math.exp %79 : vector<16x128xf32>
    %cst_41 = arith.constant 1.000000e+00 : f32
    %83 = vector.broadcast %cst_41 : f32 to vector<16x128xf32>
    %84 = arith.subf %82, %83 : vector<16x128xf32>
    %85 = arith.select %81, %79, %84 : vector<16x128xi1>, vector<16x128xf32>
    %c1_42 = arith.constant 1 : index
    %c0_43 = arith.constant 0 : index
    %c0_44 = arith.constant 0 : index
    %86 = vector.load %arg6[%c1_42, %c0_43, %c0_44] : memref<2x16x128xf32, #tpu.memory_space<vmem>>, vector<1x16x128xf32>
    %87 = vector.shape_cast %86 : vector<1x16x128xf32> to vector<16x128xf32>
    %88 = vector.shape_cast %85 : vector<16x128xf32> to vector<1x16x128xf32>
    tpu.vector_store %arg6[%c1_42, %c0_43, %c0_44], %88 {strides = array<i32>} : memref<2x16x128xf32, #tpu.memory_space<vmem>>, vector<1x16x128xf32>,
    return
  }
  func.func @transform_0(%arg0: i32) -> (i32, i32, i32) {
    %c0_i32 = arith.constant 0 : i32
    %c0_i32_0 = arith.constant 0 : i32
    %c0_i32_1 = arith.constant 0 : i32
    return %arg0, %c0_i32, %c0_i32_0 : i32, i32, i32
  }
  func.func @transform_1(%arg0: i32) -> (i32, i32) {
    %c0_i32 = arith.constant 0 : i32
    %c0_i32_0 = arith.constant 0 : i32
    %c0_i32_1 = arith.constant 0 : i32
    return %c0_i32, %c0_i32_0 : i32, i32
  }
  func.func @transform_2(%arg0: i32) -> (i32, i32) {
    %c0_i32 = arith.constant 0 : i32
    %c0_i32_0 = arith.constant 0 : i32
    %c0_i32_1 = arith.constant 0 : i32
    return %c0_i32, %c0_i32_0 : i32, i32
  }
  func.func @transform_3(%arg0: i32) -> (i32, i32) {
    %c0_i32 = arith.constant 0 : i32
    %c0_i32_0 = arith.constant 0 : i32
    %c0_i32_1 = arith.constant 0 : i32
    return %c0_i32, %c0_i32_0 : i32, i32
  }
  func.func @transform_4(%arg0: i32) -> (i32, i32, i32) {
    %c0_i32 = arith.constant 0 : i32
    %c0_i32_0 = arith.constant 0 : i32
    %c0_i32_1 = arith.constant 0 : i32
    return %arg0, %c0_i32, %c0_i32_0 : i32, i32, i32
  }
  func.func @transform_5(%arg0: i32) -> (i32, i32, i32) {
    %c0_i32 = arith.constant 0 : i32
    %c0_i32_0 = arith.constant 0 : i32
    %c0_i32_1 = arith.constant 0 : i32
    return %arg0, %c0_i32, %c0_i32_0 : i32, i32, i32
  }
}

</mosaic_0001>

<llo_original>
// kernel: tpu_custom_call.1
$region0: #{tpu_custom_call.1}
  #allocation0 [shape = 'u32[]', space=smem, size = 0x4, offset = 0x4, fixed_abs, tag = 'smem constant byte address 0x4 - core index']
  #allocation1 [shape = 'u32[144,128]{1,0:T(1,128)}', space=vmem, size = 0x12000, scoped, tag = 'internal scratch']
  %s0 = inlined_call_operand.vmem [shape: f32[4,16,8], index: 0, kind: input, shape index: {}]
  %s1 = inlined_call_operand.vmem [shape: f32[8,128], index: 1, kind: input, shape index: {}]
  %s2 = inlined_call_operand.vmem [shape: f32[1,128], index: 2, kind: input, shape index: {}]
  %s3 = inlined_call_operand.vmem [shape: f32[1,128], index: 3, kind: input, shape index: {}]
  %s4 = inlined_call_operand.vmem [shape: s8[4,16,16], index: 4, kind: input, shape index: {}]
  %s5 = inlined_call_operand.hbm [shape: f32[4,16,128], index: 5, kind: output, shape index: {}]
  %s6 = sld [smem:[#allocation0]]
  $region53: #{tpu_custom_call.1} parent=0
    _
  %s8 = ssub.s32 1, %s6
  %s9 = scalar_select 0, %s8, %s6
  $region1: #{tpu_custom_call.1} parent=0
    #allocation2 [shape = 'u8[32768]{0}', space=vmem, size = 0x8000, scoped, tag = 'output window, operand 0']
    #allocation3 [shape = 's32[2]{0}', space=sflag, size = 0x8, scoped, tag = 'scoped memory for tpu_custom_call.1']
    %10 = vsyncpa [#allocation3], 0
    %s11 = scalar_lea.sflag [#allocation3], 1
    %12 = vsyncpa %s11, 0
    loop: start=0, step=1, limit=4
    $region2: #{tpu_custom_call.1} parent=1 // loop_pre_header
      _
    $region3: #{tpu_custom_call.1} parent=1 // loop_header
      %s14 = sphi 0, %s18
      %p15 = scmp.ge.s32.totalorder %s14, 4
      %s24 = sphi 0, %s26
      %s27 = sphi 0, %s24
      %s28 = sphi 0, %s27
      %s44 = sphi 0, %s28
      %s48 = sphi 0, %s48
      %s50 = sphi 0, %s48
      %s51 = sphi 0, %s50
      %s65 = sphi 0, %s51
      %s69 = sphi 0, %s69
      %s71 = sphi 0, %s69
      %s72 = sphi 0, %s71
      %s86 = sphi 0, %s72
      %s90 = sphi 0, %s90
      %s92 = sphi 0, %s90
      %s93 = sphi 0, %s92
      %s107 = sphi 0, %s93
      %s113 = sphi 0, %s115
      %s116 = sphi 0, %s113
      %s117 = sphi 0, %s116
      %s133 = sphi 0, %s117
      %s139 = sphi 0, %s141
      %s142 = sphi 0, %s139
      %s143 = sphi 0, %s142
      %s159 = sphi 0, %s143
    $region4: #{tpu_custom_call.1} parent=1 // loop_header_branch
      %17 = sbr.rel (%p15) target = $region8
    $region5: #{tpu_custom_call.1} parent=1 // loop_body
      %s19 = ssub.s32 %s14, 1
      %s20 = ssub.s32 %s14, 2
      %s21 = sadd.s32 %s14, 1
      %s22 = ssub.s32 %s14, %s21
      %p23 = scmp.eq.s32.totalorder %s22, 0
      %s25 = sadd.s32 %s24, 1
      %s26 = scalar_select %p23, %s24, %s25
      %p29 = pneg %p23
      %p30 = scmp.eq.s32.totalorder %s14, 1
      %p31 = por %p29, %p30
      %p32 = scmp.ne.s32.totalorder %s24, %s27
      %p33 = scmp.eq.s32.totalorder %s14, 0
      %p34 = por %p32, %p33
      %p35 = scmp.ne.s32.totalorder %s24, %s27
      %p36 = scmp.eq.s32.totalorder %s19, 1
      %p37 = por %p35, %p36
      %p38 = scmp.ne.s32.totalorder %s27, %s28
      %p39 = scmp.eq.s32.totalorder %s19, 0
      %p40 = por %p38, %p39
      %p41 = scmp.ne.s32.totalorder %s27, %s28
      %p42 = scmp.eq.s32.totalorder %s20, 1
      %p43 = por %p41, %p42
      %p45 = scmp.ne.s32.totalorder %s28, %s44
      %p46 = scmp.eq.s32.totalorder %s20, 0
      %p47 = por %p45, %p46
      %s49 = sadd.s32 %s48, 1
      %p52 = scmp.eq.s32.totalorder %s14, 1
      %p53 = scmp.ne.s32.totalorder %s48, %s50
      %p54 = scmp.eq.s32.totalorder %s14, 0
      %p55 = por %p53, %p54
      %p56 = scmp.ne.s32.totalorder %s48, %s50
      %p57 = scmp.eq.s32.totalorder %s19, 1
      %p58 = por %p56, %p57
      %p59 = scmp.ne.s32.totalorder %s50, %s51
      %p60 = scmp.eq.s32.totalorder %s19, 0
      %p61 = por %p59, %p60
      %p62 = scmp.ne.s32.totalorder %s50, %s51
      %p63 = scmp.eq.s32.totalorder %s20, 1
      %p64 = por %p62, %p63
      %p66 = scmp.ne.s32.totalorder %s51, %s65
      %p67 = scmp.eq.s32.totalorder %s20, 0
      %p68 = por %p66, %p67
      %s70 = sadd.s32 %s69, 1
      %p73 = scmp.eq.s32.totalorder %s14, 1
      %p74 = scmp.ne.s32.totalorder %s69, %s71
      %p75 = scmp.eq.s32.totalorder %s14, 0
      %p76 = por %p74, %p75
      %p77 = scmp.ne.s32.totalorder %s69, %s71
      %p78 = scmp.eq.s32.totalorder %s19, 1
      %p79 = por %p77, %p78
      %p80 = scmp.ne.s32.totalorder %s71, %s72
      %p81 = scmp.eq.s32.totalorder %s19, 0
      %p82 = por %p80, %p81
      %p83 = scmp.ne.s32.totalorder %s71, %s72
      %p84 = scmp.eq.s32.totalorder %s20, 1
      %p85 = por %p83, %p84
      %p87 = scmp.ne.s32.totalorder %s72, %s86
      %p88 = scmp.eq.s32.totalorder %s20, 0
      %p89 = por %p87, %p88
      %s91 = sadd.s32 %s90, 1
      %p94 = scmp.eq.s32.totalorder %s14, 1
      %p95 = scmp.ne.s32.totalorder %s90, %s92
      %p96 = scmp.eq.s32.totalorder %s14, 0
      %p97 = por %p95, %p96
      %p98 = scmp.ne.s32.totalorder %s90, %s92
      %p99 = scmp.eq.s32.totalorder %s19, 1
      %p100 = por %p98, %p99
      %p101 = scmp.ne.s32.totalorder %s92, %s93
      %p102 = scmp.eq.s32.totalorder %s19, 0
      %p103 = por %p101, %p102
      %p104 = scmp.ne.s32.totalorder %s92, %s93
      %p105 = scmp.eq.s32.totalorder %s20, 1
      %p106 = por %p104, %p105
      %p108 = scmp.ne.s32.totalorder %s93, %s107
      %p109 = scmp.eq.s32.totalorder %s20, 0
      %p110 = por %p108, %p109
      %s111 = ssub.s32 %s14, %s21
      %p112 = scmp.eq.s32.totalorder %s111, 0
      %s114 = sadd.s32 %s113, 1
      %s115 = scalar_select %p112, %s113, %s114
      %p118 = pneg %p112
      %p119 = scmp.eq.s32.totalorder %s14, 1
      %p120 = por %p118, %p119
      %p121 = scmp.ne.s32.totalorder %s113, %s116
      %p122 = scmp.eq.s32.totalorder %s14, 0
      %p123 = por %p121, %p122
      %p124 = scmp.ne.s32.totalorder %s113, %s116
      %p125 = scmp.eq.s32.totalorder %s19, 1
      %p126 = por %p124, %p125
      %p127 = scmp.ne.s32.totalorder %s116, %s117
      %p128 = scmp.eq.s32.totalorder %s19, 0
      %p129 = por %p127, %p128
      %p130 = scmp.ne.s32.totalorder %s116, %s117
      %p131 = scmp.eq.s32.totalorder %s20, 1
      %p132 = por %p130, %p131
      %p134 = scmp.ne.s32.totalorder %s117, %s133
      %p135 = scmp.eq.s32.totalorder %s20, 0
      %p136 = por %p134, %p135
      %s137 = ssub.s32 %s14, %s21
      %p138 = scmp.eq.s32.totalorder %s137, 0
      %s140 = sadd.s32 %s139, 1
      %s141 = scalar_select %p138, %s139, %s140
      %p144 = pneg %p138
      %p145 = scmp.eq.s32.totalorder %s14, 1
      %p146 = por %p144, %p145
      %p147 = scmp.ne.s32.totalorder %s139, %s142
      %p148 = scmp.eq.s32.totalorder %s14, 0
      %p149 = por %p147, %p148
      %p150 = scmp.ne.s32.totalorder %s139, %s142
      %p151 = scmp.eq.s32.totalorder %s19, 1
      %p152 = por %p150, %p151
      %p153 = scmp.ne.s32.totalorder %s142, %s143
      %p154 = scmp.eq.s32.totalorder %s19, 0
      %p155 = por %p153, %p154
      %p156 = scmp.ne.s32.totalorder %s142, %s143
      %p157 = scmp.eq.s32.totalorder %s20, 1
      %p158 = por %p156, %p157
      %p160 = scmp.ne.s32.totalorder %s143, %s159
      %p161 = scmp.eq.s32.totalorder %s20, 0
      %p162 = por %p160, %p161
      %p163 = scmp.le.s32.totalorder 1, %s14
      %p164 = scmp.lt.s32.totalorder %s14, 3
      %p165 = pnand %p163, %p164
      %p166 = pneg %p165
      // Predicated region
      $region9: #{tpu_custom_call.1} parent=5 // pred_check
        _
      $region10: #{tpu_custom_call.1} parent=5 // pred_check_branch
        %168 = sbr.rel (%p165) target = $region12
      $region11: #{tpu_custom_call.1} parent=5 // pred_region
        %s169 = ssub.s32 %s14, 1
        // Predicated region
        $region13: #{tpu_custom_call.1} parent=11 // pred_check
          %p170 = pneg %p61
        $region14: #{tpu_custom_call.1} parent=11 // pred_check_branch
          %172 = sbr.rel (%p170) target = $region16
        $region15: #{tpu_custom_call.1} parent=11 // pred_region
          _
        $region16: #{tpu_custom_call.1} parent=11 // pred_fallthru
          _
        // Predicated region
        $region17: #{tpu_custom_call.1} parent=11 // pred_check
          %p173 = pneg %p82
        $region18: #{tpu_custom_call.1} parent=11 // pred_check_branch
          %175 = sbr.rel (%p173) target = $region20
        $region19: #{tpu_custom_call.1} parent=11 // pred_region
          _
        $region20: #{tpu_custom_call.1} parent=11 // pred_fallthru
          _
        // Predicated region
        $region21: #{tpu_custom_call.1} parent=11 // pred_check
          %p176 = pneg %p103
        $region22: #{tpu_custom_call.1} parent=11 // pred_check_branch
          %178 = sbr.rel (%p176) target = $region24
        $region23: #{tpu_custom_call.1} parent=11 // pred_region
          _
        $region24: #{tpu_custom_call.1} parent=11 // pred_fallthru
          _
      $region12: #{tpu_custom_call.1} parent=5 // pred_fallthru
        _
      %p179 = scmp.lt.s32.totalorder %s14, 2
      // Predicated region
      $region25: #{tpu_custom_call.1} parent=5 // pred_check
        %p180 = pneg %p179
      $region26: #{tpu_custom_call.1} parent=5 // pred_check_branch
        %182 = sbr.rel (%p180) target = $region28
      $region27: #{tpu_custom_call.1} parent=5 // pred_region
        // Predicated region
        $region29: #{tpu_custom_call.1} parent=27 // pred_check
          %p183 = pneg %p34
        $region30: #{tpu_custom_call.1} parent=27 // pred_check_branch
          %185 = sbr.rel (%p183) target = $region32
        $region31: #{tpu_custom_call.1} parent=27 // pred_region
          %s186 = smul.u32 2, %s14
          %p187 = scmp.lt.s32.totalorder %s186, 3
          %s188 = scalar_select %p187, %s186, 3
          %s189 = smul.addr %s188, 2
          %s190 = smul.addr %s189, 8
          %s191 = scalar_lea.vmem %s0, %s190
          %s192 = smul.u32 2, %s14
        $region32: #{tpu_custom_call.1} parent=27 // pred_fallthru
          _
        // Predicated region
        $region33: #{tpu_custom_call.1} parent=27 // pred_check
          %p193 = pneg %p123
        $region34: #{tpu_custom_call.1} parent=27 // pred_check_branch
          %195 = sbr.rel (%p193) target = $region36
        $region35: #{tpu_custom_call.1} parent=27 // pred_region
          %s196 = smul.u32 2, %s14
          %p197 = scmp.lt.s32.totalorder %s196, 3
          %s198 = scalar_select %p197, %s196, 3
          %s199 = smul.addr %s198, 2
          %s200 = smul.addr %s199, 2
          %s201 = scalar_lea.vmem %s4, %s200
          %s202 = smul.u32 2, %s14
        $region36: #{tpu_custom_call.1} parent=27 // pred_fallthru
          _
      $region28: #{tpu_custom_call.1} parent=5 // pred_fallthru
        _
      %p203 = scmp.le.s32.totalorder 1, %s14
      %p204 = scmp.lt.s32.totalorder %s14, 3
      %p205 = pnand %p203, %p204
      %p206 = pneg %p205
      // Predicated region
      $region37: #{tpu_custom_call.1} parent=5 // pred_check
        _
      $region38: #{tpu_custom_call.1} parent=5 // pred_check_branch
        %208 = sbr.rel (%p205) target = $region40
      $region39: #{tpu_custom_call.1} parent=5 // pred_region
        %s209 = ssub.s32 %s14, 1
        %s210 = smul.u32 2, %s19
        %p211 = scmp.lt.s32.totalorder %s210, 3
        %s212 = scalar_select %p211, %s210, 3
        %s213 = smul.addr %s212, 2
        %s214 = smul.addr %s213, 8
        %s215 = scalar_lea.vmem %s0, %s214
        %p216 = pneg %p40
        %p217 = pneg %p37
        %p218 = pneg %p61
        %p219 = pneg %p58
        %p220 = pneg %p82
        %p221 = pneg %p79
        %p222 = pneg %p103
        %p223 = pneg %p100
        %s224 = smul.u32 2, %s19
        %p225 = scmp.lt.s32.totalorder %s224, 3
        %s226 = scalar_select %p225, %s224, 3
        %s227 = smul.addr %s226, 2
        %s228 = smul.addr %s227, 2
        %s229 = scalar_lea.vmem %s4, %s228
        %p230 = pneg %p129
        %p231 = pneg %p126
        %p232 = pneg %p155
        %p233 = pneg %p152
        %s234 = sand.u32 %s142, 1
        %s235 = scalar_lea.sflag [#allocation3], %s234
        %s236 = sand.u32 %s142, 1
        %s237 = smul.addr %s236, 32
        %s238 = scalar_lea.vmem [#allocation2], %s237
        %s239 = smul.u32 2, %s19
        %p240 = scmp.lt.s32.totalorder %s239, 3
        %s241 = scalar_select %p240, %s239, 3
        %s242 = smul.addr %s241, 2
        %s243 = smul.addr %s242, 8
        %s244 = scalar_lea.vmem %s0, %s243
        %s245 = smul.u32 2, %s19
        %s246 = smul.u32 2, %s19
        %p247 = scmp.lt.s32.totalorder %s246, 3
        %s248 = scalar_select %p247, %s246, 3
        %s249 = smul.addr %s248, 2
        %s250 = smul.addr %s249, 2
        %s251 = scalar_lea.vmem %s4, %s250
        %s252 = smul.u32 2, %s19
        %s253 = smul.u32 2, %s19
        %v254 = vld [vmem:[%s1] sm:$0xff]
        %v255 = vld [vmem:[%s2] sm:$0x1]
        %v256 = vld [vmem:[%s3] sm:$0x1]
        %v257 = vld [vmem:[%s244] sm:$0xff]
        %v258 = vld [vmem:[%s244 + $0x8] sm:$0xff]
        %vm259 = vcmask 64512
        %v261 = vsel %vm259, %v257, 0
        %v264 = vsel %vm259, %v258, 0
        %266 = vmatprep.subr.mxu0 0.0
        %267 = vmatpush1.msra.mxu0 %v254
        %268 = vmatprep.subr.mxu0 0.0
        %269 = vmatpush1.msra.mxu0 0.0
        %270 = vmatprep.subr.mxu0 0.0
        %271 = vmatpush1.msra.mxu0 0.0
        %272 = vmatprep.subr.mxu0 0.0
        %273 = vmatpush1.msra.mxu0 0.0
        %274 = vmatprep.subr.mxu0 0.0
        %275 = vmatpush1.msra.mxu0 0.0
        %276 = vmatprep.subr.mxu0 0.0
        %277 = vmatpush1.msra.mxu0 0.0
        %278 = vmatprep.subr.mxu0 0.0
        %279 = vmatpush1.msra.mxu0 0.0
        %280 = vmatprep.subr.mxu0 0.0
        %281 = vmatpush1.msra.mxu0 0.0
        %282 = vmatprep.subr.mxu0 0.0
        %283 = vmatpush1.msra.mxu0 0.0
        %284 = vmatprep.subr.mxu0 0.0
        %285 = vmatpush1.msra.mxu0 0.0
        %286 = vmatprep.subr.mxu0 0.0
        %287 = vmatpush1.msra.mxu0 0.0
        %288 = vmatprep.subr.mxu0 0.0
        %289 = vmatpush1.msra.mxu0 0.0
        %290 = vmatprep.subr.mxu0 0.0
        %291 = vmatpush1.msra.mxu0 0.0
        %292 = vmatprep.subr.mxu0 0.0
        %293 = vmatpush1.msra.mxu0 0.0
        %294 = vmatprep.subr.mxu0 0.0
        %295 = vmatpush1.msra.mxu0 0.0
        %296 = vmatprep.subr.mxu0 0.0
        %297 = vmatpush1.msra.mxu0 0.0
        %298 = vmatprep.subr.mxu0 0.0
        %299 = vmatpush1.msra.mxu0 0.0
        %300 = vmatprep.subr.mxu0 0.0
        %301 = vmatpush1.msra.mxu0 0.0
        %302 = vmatprep.subr.mxu0 0.0
        %303 = vmatpush1.msra.mxu0 0.0
        %304 = vmatprep.subr.mxu0 0.0
        %305 = vmatpush1.msra.mxu0 0.0
        %306 = vmatprep.subr.mxu0 0.0
        %307 = vmatpush1.msra.mxu0 0.0
        %308 = vmatprep.subr.mxu0 0.0
        %309 = vmatpush1.msra.mxu0 0.0
        %310 = vmatprep.subr.mxu0 0.0
        %311 = vmatpush1.msra.mxu0 0.0
        %312 = vmatprep.subr.mxu0 0.0
        %313 = vmatpush1.msra.mxu0 0.0
        %314 = vmatprep.subr.mxu0 0.0
        %315 = vmatpush1.msra.mxu0 0.0
        %316 = vmatprep.subr.mxu0 0.0
        %317 = vmatpush1.msra.mxu0 0.0
        %318 = vmatprep.subr.mxu0 0.0
        %319 = vmatpush1.msra.mxu0 0.0
        %320 = vmatprep.subr.mxu0 0.0
        %321 = vmatpush1.msra.mxu0 0.0
        %322 = vmatprep.subr.mxu0 0.0
        %323 = vmatpush1.msra.mxu0 0.0
        %324 = vmatprep.subr.mxu0 0.0
        %325 = vmatpush1.msra.mxu0 0.0
        %326 = vmatprep.subr.mxu0 0.0
        %327 = vmatpush1.msra.mxu0 0.0
        %328 = vmatprep.subr.mxu0 0.0
        %329 = vmatpush1.msra.mxu0 0.0
        %330 = vmatprep.mubr.f32.mxu0 0.0
        %331 = vmatmul.mubr.f32.gmra.mrb[0].mxu0 %v261
        %v332 = vpop.f32.mrb[0].mxu0
        %v333 = vadd.f32 0.0, %v332
        %v334 = vpop.f32.mrb[0].mxu0
        %335 = vmatprep.mubr.f32.mxu0 0.0
        %336 = vmatmul.mubr.f32.gmra.mrb[0].mxu0 %v264
        %v337 = vpop.f32.mrb[0].mxu0
        %v338 = vadd.f32 0.0, %v337
        %v339 = vpop.f32.mrb[0].mxu0
        %340 = vdwg.mxu0
        %v342 = vlaneseq
        %v343 = vshrl.u32 %v342, 7
        %v344 = vsub.s32 0, %v343
        %v345 = vrot.slane %v255, %v344
        %v347 = vmul.f32 %v333, %v345
        %v348 = vmul.f32 %v338, %v345
        %349 = vadd.xlane.f32.xlu0 %v347
        %v350 = vpop.xlane.xlu0 %349
        %351 = vadd.xlane.f32.xlu0 %v348
        %v352 = vpop.xlane.xlu0 %351
        %353 = vmatprep.subr.mxu0 0.0
        %354 = vmatpush1.xpose.msra.mxu0 %v333
        %355 = vmatprep.subr.mxu0 0.0
        %356 = vmatpush1.xpose.msra.mxu0 %v338
        %357 = vmatprep.subr.mxu0 0.0
        %358 = vmatpush1.xpose.msra.mxu0 0.0
        %359 = vmatprep.subr.mxu0 0.0
        %360 = vmatpush1.xpose.msra.mxu0 0.0
        %361 = vmatprep.subr.mxu0 0.0
        %362 = vmatpush1.xpose.msra.mxu0 0.0
        %363 = vmatprep.subr.mxu0 0.0
        %364 = vmatpush1.xpose.msra.mxu0 0.0
        %365 = vmatprep.subr.mxu0 0.0
        %366 = vmatpush1.xpose.msra.mxu0 0.0
        %367 = vmatprep.subr.mxu0 0.0
        %368 = vmatpush1.xpose.msra.mxu0 0.0
        %369 = vmatprep.subr.mxu0 0.0
        %370 = vmatpush1.xpose.msra.mxu0 0.0
        %371 = vmatprep.subr.mxu0 0.0
        %372 = vmatpush1.xpose.msra.mxu0 0.0
        %373 = vmatprep.subr.mxu0 0.0
        %374 = vmatpush1.xpose.msra.mxu0 0.0
        %375 = vmatprep.subr.mxu0 0.0
        %376 = vmatpush1.xpose.msra.mxu0 0.0
        %377 = vmatprep.subr.mxu0 0.0
        %378 = vmatpush1.xpose.msra.mxu0 0.0
        %379 = vmatprep.subr.mxu0 0.0
        %380 = vmatpush1.xpose.msra.mxu0 0.0
        %381 = vmatprep.subr.mxu0 0.0
        %382 = vmatpush1.xpose.msra.mxu0 0.0
        %383 = vmatprep.subr.mxu0 0.0
        %384 = vmatpush1.xpose.msra.mxu0 0.0
        %385 = vmatprep.subr.mxu0 0.0
        %386 = vmatpush1.xpose.msra.mxu0 0.0
        %387 = vmatprep.subr.mxu0 0.0
        %388 = vmatpush1.xpose.msra.mxu0 0.0
        %389 = vmatprep.subr.mxu0 0.0
        %390 = vmatpush1.xpose.msra.mxu0 0.0
        %391 = vmatprep.subr.mxu0 0.0
        %392 = vmatpush1.xpose.msra.mxu0 0.0
        %393 = vmatprep.subr.mxu0 0.0
        %394 = vmatpush1.xpose.msra.mxu0 0.0
        %395 = vmatprep.subr.mxu0 0.0
        %396 = vmatpush1.xpose.msra.mxu0 0.0
        %397 = vmatprep.subr.mxu0 0.0
        %398 = vmatpush1.xpose.msra.mxu0 0.0
        %399 = vmatprep.subr.mxu0 0.0
        %400 = vmatpush1.xpose.msra.mxu0 0.0
        %401 = vmatprep.subr.mxu0 0.0
        %402 = vmatpush1.xpose.msra.mxu0 0.0
        %403 = vmatprep.subr.mxu0 0.0
        %404 = vmatpush1.xpose.msra.mxu0 0.0
        %405 = vmatprep.subr.mxu0 0.0
        %406 = vmatpush1.xpose.msra.mxu0 0.0
        %407 = vmatprep.subr.mxu0 0.0
        %408 = vmatpush1.xpose.msra.mxu0 0.0
        %409 = vmatprep.subr.mxu0 0.0
        %410 = vmatpush1.xpose.msra.mxu0 0.0
        %411 = vmatprep.subr.mxu0 0.0
        %412 = vmatpush1.xpose.msra.mxu0 0.0
        %413 = vmatprep.subr.mxu0 0.0
        %414 = vmatpush1.xpose.msra.mxu0 0.0
        %415 = vmatprep.subr.mxu0 0.0
        %416 = vmatpush1.xpose.msra.mxu0 0.0
        %417 = vmatprep.mubr.f32.mxu0 0.0
        %418 = vmatmul.mubr.f32.gmra.mrb[0].mxu0 %v256
        %v419 = vpop.f32.mrb[0].mxu0
        %v420 = vadd.f32 0.0, %v419
        %v421 = vpop.f32.mrb[0].mxu0
        %422 = vdwg.mxu0
        %v423 = vlaneseq
        %v424 = vshrl.u32 %v423, 7
        %v425 = vsub.s32 0, %v424
        %v426 = vrot.slane %v420, %v425
        %v427 = vadd.f32 %v350, %v426
        %v428 = vadd.f32 %v352, %v426
        %vm429 = vcmp.gt.f32.partialorder %v427, 0.0
        %vm430 = vcmp.gt.f32.partialorder %v428, 0.0
        %v431 = vmul.f32 %v427, 0.2
        %v432 = vmul.f32 %v428, 0.2
        %v433 = vsel %vm429, %v427, %v431
        %v434 = vsel %vm430, %v428, %v432
        %v435 = vld [vmem:[%s251] sm:$0x3]
        %v436 = vld [vmem:[%s251 + $0x2] sm:$0x3]
        %v437 = vunpack.c.0.s8 %v435
        %v438 = vunpack.c.0.s8 %v436
        %v439 = vcvt.s32.f32 %v437
        %v440 = vcvt.s32.f32 %v438
        %vm441 = vcmp.gt.f32.partialorder %v439, 0.0
        %vm442 = vcmp.gt.f32.partialorder %v440, 0.0
        %v443 = vsel %vm441, %v433, -9e+15
        %v444 = vsel %vm442, %v434, -9e+15
        %vm445 = vcmask 130048
        %v446 = vsel %vm445, %v443, -inf
        %447 = vmax.xlane.f32.xlu0 %v446
        %v448 = vpop.xlane.xlu0 %447
        %v449 = vsel %vm445, %v444, -inf
        %450 = vmax.xlane.f32.xlu0 %v449
        %v451 = vpop.xlane.xlu0 %450
        %v452 = vsub.f32 %v443, %v448
        %v453 = vsub.f32 %v444, %v451
        %v454 = vmul.f32 %v452, 1.442695
        %v455 = vpow.pop %v454
        %v456 = vmul.f32 %v453, 1.442695
        %v457 = vpow.pop %v456
        %v458 = vsel %vm445, %v455, 0.0
        %459 = vadd.xlane.f32.xlu0 %v458
        %v460 = vpop.xlane.xlu0 %459
        %v461 = vsel %vm445, %v457, 0.0
        %462 = vadd.xlane.f32.xlu0 %v461
        %v463 = vpop.xlane.xlu0 %462
        %v465 = vsel %vm445, %v455, 0
        %v468 = vsel %vm445, %v457, 0
        %470 = vmatprep.subr.mxu0 0.0
        %471 = vmatpush1.msra.mxu0 %v333
        %472 = vmatprep.subr.mxu0 0.0
        %473 = vmatpush1.msra.mxu0 %v338
        %474 = vmatprep.subr.mxu0 0.0
        %475 = vmatpush1.msra.mxu0 0.0
        %476 = vmatprep.subr.mxu0 0.0
        %477 = vmatpush1.msra.mxu0 0.0
        %478 = vmatprep.subr.mxu0 0.0
        %479 = vmatpush1.msra.mxu0 0.0
        %480 = vmatprep.subr.mxu0 0.0
        %481 = vmatpush1.msra.mxu0 0.0
        %482 = vmatprep.subr.mxu0 0.0
        %483 = vmatpush1.msra.mxu0 0.0
        %484 = vmatprep.subr.mxu0 0.0
        %485 = vmatpush1.msra.mxu0 0.0
        %486 = vmatprep.subr.mxu0 0.0
        %487 = vmatpush1.msra.mxu0 0.0
        %488 = vmatprep.subr.mxu0 0.0
        %489 = vmatpush1.msra.mxu0 0.0
        %490 = vmatprep.subr.mxu0 0.0
        %491 = vmatpush1.msra.mxu0 0.0
        %492 = vmatprep.subr.mxu0 0.0
        %493 = vmatpush1.msra.mxu0 0.0
        %494 = vmatprep.subr.mxu0 0.0
        %495 = vmatpush1.msra.mxu0 0.0
        %496 = vmatprep.subr.mxu0 0.0
        %497 = vmatpush1.msra.mxu0 0.0
        %498 = vmatprep.subr.mxu0 0.0
        %499 = vmatpush1.msra.mxu0 0.0
        %500 = vmatprep.subr.mxu0 0.0
        %501 = vmatpush1.msra.mxu0 0.0
        %502 = vmatprep.subr.mxu0 0.0
        %503 = vmatpush1.msra.mxu0 0.0
        %504 = vmatprep.subr.mxu0 0.0
        %505 = vmatpush1.msra.mxu0 0.0
        %506 = vmatprep.subr.mxu0 0.0
        %507 = vmatpush1.msra.mxu0 0.0
        %508 = vmatprep.subr.mxu0 0.0
        %509 = vmatpush1.msra.mxu0 0.0
        %510 = vmatprep.subr.mxu0 0.0
        %511 = vmatpush1.msra.mxu0 0.0
        %512 = vmatprep.subr.mxu0 0.0
        %513 = vmatpush1.msra.mxu0 0.0
        %514 = vmatprep.subr.mxu0 0.0
        %515 = vmatpush1.msra.mxu0 0.0
        %516 = vmatprep.subr.mxu0 0.0
        %517 = vmatpush1.msra.mxu0 0.0
        %518 = vmatprep.subr.mxu0 0.0
        %519 = vmatpush1.msra.mxu0 0.0
        %520 = vmatprep.subr.mxu0 0.0
        %521 = vmatpush1.msra.mxu0 0.0
        %522 = vmatprep.subr.mxu0 0.0
        %523 = vmatpush1.msra.mxu0 0.0
        %524 = vmatprep.subr.mxu0 0.0
        %525 = vmatpush1.msra.mxu0 0.0
        %526 = vmatprep.subr.mxu0 0.0
        %527 = vmatpush1.msra.mxu0 0.0
        %528 = vmatprep.subr.mxu0 0.0
        %529 = vmatpush1.msra.mxu0 0.0
        %530 = vmatprep.subr.mxu0 0.0
        %531 = vmatpush1.msra.mxu0 0.0
        %532 = vmatprep.subr.mxu0 0.0
        %533 = vmatpush1.msra.mxu0 0.0
        %534 = vmatprep.mubr.f32.mxu0 0.0
        %535 = vmatmul.mubr.f32.gmra.mrb[0].mxu0 %v465
        %v536 = vpop.f32.mrb[0].mxu0
        %v537 = vadd.f32 0.0, %v536
        %v538 = vpop.f32.mrb[0].mxu0
        %539 = vmatprep.mubr.f32.mxu0 0.0
        %540 = vmatmul.mubr.f32.gmra.mrb[0].mxu0 %v468
        %v541 = vpop.f32.mrb[0].mxu0
        %v542 = vadd.f32 0.0, %v541
        %v543 = vpop.f32.mrb[0].mxu0
        %544 = vdwg.mxu0
        %v545 = vrcp.pop %v460
        %v546 = vrcp.pop %v463
        %v547 = vmul.f32 %v537, %v545
        %v548 = vmul.f32 %v542, %v546
        %vm549 = vcmp.gt.f32.partialorder %v547, 0.0
        %vm550 = vcmp.gt.f32.partialorder %v548, 0.0
        %v551 = vmul.f32 %v547, 1.442695
        %v552 = vpow.pop %v551
        %v553 = vmul.f32 %v548, 1.442695
        %v554 = vpow.pop %v553
        %v555 = vsub.f32 %v552, 1.0
        %v556 = vsub.f32 %v554, 1.0
        %v557 = vsel %vm549, %v547, %v555
        %v558 = vsel %vm550, %v548, %v556
        %559 = vst [vmem:[%s238] sm:$0xff] %v557
        %560 = vst [vmem:[%s238 + $0x8] sm:$0xff] %v558
        %s561 = scalar_lea.vmem %s244, 16
        %v562 = vld [vmem:[%s561] sm:$0xff]
        %v563 = vld [vmem:[%s561 + $0x8] sm:$0xff]
        %v565 = vsel %vm259, %v562, 0
        %v568 = vsel %vm259, %v563, 0
        %570 = vmatprep.subr.mxu0 0.0
        %571 = vmatpush1.msra.mxu0 %v254
        %572 = vmatprep.subr.mxu0 0.0
        %573 = vmatpush1.msra.mxu0 0.0
        %574 = vmatprep.subr.mxu0 0.0
        %575 = vmatpush1.msra.mxu0 0.0
        %576 = vmatprep.subr.mxu0 0.0
        %577 = vmatpush1.msra.mxu0 0.0
        %578 = vmatprep.subr.mxu0 0.0
        %579 = vmatpush1.msra.mxu0 0.0
        %580 = vmatprep.subr.mxu0 0.0
        %581 = vmatpush1.msra.mxu0 0.0
        %582 = vmatprep.subr.mxu0 0.0
        %583 = vmatpush1.msra.mxu0 0.0
        %584 = vmatprep.subr.mxu0 0.0
        %585 = vmatpush1.msra.mxu0 0.0
        %586 = vmatprep.subr.mxu0 0.0
        %587 = vmatpush1.msra.mxu0 0.0
        %588 = vmatprep.subr.mxu0 0.0
        %589 = vmatpush1.msra.mxu0 0.0
        %590 = vmatprep.subr.mxu0 0.0
        %591 = vmatpush1.msra.mxu0 0.0
        %592 = vmatprep.subr.mxu0 0.0
        %593 = vmatpush1.msra.mxu0 0.0
        %594 = vmatprep.subr.mxu0 0.0
        %595 = vmatpush1.msra.mxu0 0.0
        %596 = vmatprep.subr.mxu0 0.0
        %597 = vmatpush1.msra.mxu0 0.0
        %598 = vmatprep.subr.mxu0 0.0
        %599 = vmatpush1.msra.mxu0 0.0
        %600 = vmatprep.subr.mxu0 0.0
        %601 = vmatpush1.msra.mxu0 0.0
        %602 = vmatprep.subr.mxu0 0.0
        %603 = vmatpush1.msra.mxu0 0.0
        %604 = vmatprep.subr.mxu0 0.0
        %605 = vmatpush1.msra.mxu0 0.0
        %606 = vmatprep.subr.mxu0 0.0
        %607 = vmatpush1.msra.mxu0 0.0
        %608 = vmatprep.subr.mxu0 0.0
        %609 = vmatpush1.msra.mxu0 0.0
        %610 = vmatprep.subr.mxu0 0.0
        %611 = vmatpush1.msra.mxu0 0.0
        %612 = vmatprep.subr.mxu0 0.0
        %613 = vmatpush1.msra.mxu0 0.0
        %614 = vmatprep.subr.mxu0 0.0
        %615 = vmatpush1.msra.mxu0 0.0
        %616 = vmatprep.subr.mxu0 0.0
        %617 = vmatpush1.msra.mxu0 0.0
        %618 = vmatprep.subr.mxu0 0.0
        %619 = vmatpush1.msra.mxu0 0.0
        %620 = vmatprep.subr.mxu0 0.0
        %621 = vmatpush1.msra.mxu0 0.0
        %622 = vmatprep.subr.mxu0 0.0
        %623 = vmatpush1.msra.mxu0 0.0
        %624 = vmatprep.subr.mxu0 0.0
        %625 = vmatpush1.msra.mxu0 0.0
        %626 = vmatprep.subr.mxu0 0.0
        %627 = vmatpush1.msra.mxu0 0.0
        %628 = vmatprep.subr.mxu0 0.0
        %629 = vmatpush1.msra.mxu0 0.0
        %630 = vmatprep.subr.mxu0 0.0
        %631 = vmatpush1.msra.mxu0 0.0
        %632 = vmatprep.subr.mxu0 0.0
        %633 = vmatpush1.msra.mxu0 0.0
        %634 = vmatprep.mubr.f32.mxu0 0.0
        %635 = vmatmul.mubr.f32.gmra.mrb[0].mxu0 %v565
        %v636 = vpop.f32.mrb[0].mxu0
        %v637 = vadd.f32 0.0, %v636
        %v638 = vpop.f32.mrb[0].mxu0
        %639 = vmatprep.mubr.f32.mxu0 0.0
        %640 = vmatmul.mubr.f32.gmra.mrb[0].mxu0 %v568
        %v641 = vpop.f32.mrb[0].mxu0
        %v642 = vadd.f32 0.0, %v641
        %v643 = vpop.f32.mrb[0].mxu0
        %644 = vdwg.mxu0
        %v645 = vmul.f32 %v637, %v345
        %v646 = vmul.f32 %v642, %v345
        %647 = vadd.xlane.f32.xlu0 %v645
        %v648 = vpop.xlane.xlu0 %647
        %649 = vadd.xlane.f32.xlu0 %v646
        %v650 = vpop.xlane.xlu0 %649
        %651 = vmatprep.subr.mxu0 0.0
        %652 = vmatpush1.xpose.msra.mxu0 %v637
        %653 = vmatprep.subr.mxu0 0.0
        %654 = vmatpush1.xpose.msra.mxu0 %v642
        %655 = vmatprep.subr.mxu0 0.0
        %656 = vmatpush1.xpose.msra.mxu0 0.0
        %657 = vmatprep.subr.mxu0 0.0
        %658 = vmatpush1.xpose.msra.mxu0 0.0
        %659 = vmatprep.subr.mxu0 0.0
        %660 = vmatpush1.xpose.msra.mxu0 0.0
        %661 = vmatprep.subr.mxu0 0.0
        %662 = vmatpush1.xpose.msra.mxu0 0.0
        %663 = vmatprep.subr.mxu0 0.0
        %664 = vmatpush1.xpose.msra.mxu0 0.0
        %665 = vmatprep.subr.mxu0 0.0
        %666 = vmatpush1.xpose.msra.mxu0 0.0
        %667 = vmatprep.subr.mxu0 0.0
        %668 = vmatpush1.xpose.msra.mxu0 0.0
        %669 = vmatprep.subr.mxu0 0.0
        %670 = vmatpush1.xpose.msra.mxu0 0.0
        %671 = vmatprep.subr.mxu0 0.0
        %672 = vmatpush1.xpose.msra.mxu0 0.0
        %673 = vmatprep.subr.mxu0 0.0
        %674 = vmatpush1.xpose.msra.mxu0 0.0
        %675 = vmatprep.subr.mxu0 0.0
        %676 = vmatpush1.xpose.msra.mxu0 0.0
        %677 = vmatprep.subr.mxu0 0.0
        %678 = vmatpush1.xpose.msra.mxu0 0.0
        %679 = vmatprep.subr.mxu0 0.0
        %680 = vmatpush1.xpose.msra.mxu0 0.0
        %681 = vmatprep.subr.mxu0 0.0
        %682 = vmatpush1.xpose.msra.mxu0 0.0
        %683 = vmatprep.subr.mxu0 0.0
        %684 = vmatpush1.xpose.msra.mxu0 0.0
        %685 = vmatprep.subr.mxu0 0.0
        %686 = vmatpush1.xpose.msra.mxu0 0.0
        %687 = vmatprep.subr.mxu0 0.0
        %688 = vmatpush1.xpose.msra.mxu0 0.0
        %689 = vmatprep.subr.mxu0 0.0
        %690 = vmatpush1.xpose.msra.mxu0 0.0
        %691 = vmatprep.subr.mxu0 0.0
        %692 = vmatpush1.xpose.msra.mxu0 0.0
        %693 = vmatprep.subr.mxu0 0.0
        %694 = vmatpush1.xpose.msra.mxu0 0.0
        %695 = vmatprep.subr.mxu0 0.0
        %696 = vmatpush1.xpose.msra.mxu0 0.0
        %697 = vmatprep.subr.mxu0 0.0
        %698 = vmatpush1.xpose.msra.mxu0 0.0
        %699 = vmatprep.subr.mxu0 0.0
        %700 = vmatpush1.xpose.msra.mxu0 0.0
        %701 = vmatprep.subr.mxu0 0.0
        %702 = vmatpush1.xpose.msra.mxu0 0.0
        %703 = vmatprep.subr.mxu0 0.0
        %704 = vmatpush1.xpose.msra.mxu0 0.0
        %705 = vmatprep.subr.mxu0 0.0
        %706 = vmatpush1.xpose.msra.mxu0 0.0
        %707 = vmatprep.subr.mxu0 0.0
        %708 = vmatpush1.xpose.msra.mxu0 0.0
        %709 = vmatprep.subr.mxu0 0.0
        %710 = vmatpush1.xpose.msra.mxu0 0.0
        %711 = vmatprep.subr.mxu0 0.0
        %712 = vmatpush1.xpose.msra.mxu0 0.0
        %713 = vmatprep.subr.mxu0 0.0
        %714 = vmatpush1.xpose.msra.mxu0 0.0
        %715 = vmatprep.mubr.f32.mxu0 0.0
        %716 = vmatmul.mubr.f32.gmra.mrb[0].mxu0 %v256
        %v717 = vpop.f32.mrb[0].mxu0
        %v718 = vadd.f32 0.0, %v717
        %v719 = vpop.f32.mrb[0].mxu0
        %720 = vdwg.mxu0
        %v721 = vlaneseq
        %v722 = vshrl.u32 %v721, 7
        %v723 = vsub.s32 0, %v722
        %v724 = vrot.slane %v718, %v723
        %v725 = vadd.f32 %v648, %v724
        %v726 = vadd.f32 %v650, %v724
        %vm727 = vcmp.gt.f32.partialorder %v725, 0.0
        %vm728 = vcmp.gt.f32.partialorder %v726, 0.0
        %v729 = vmul.f32 %v725, 0.2
        %v730 = vmul.f32 %v726, 0.2
        %v731 = vsel %vm727, %v725, %v729
        %v732 = vsel %vm728, %v726, %v730
        %s733 = scalar_lea.vmem %s251, 4
        %v734 = vld [vmem:[%s733] sm:$0x3]
        %v735 = vld [vmem:[%s733 + $0x2] sm:$0x3]
        %v736 = vunpack.c.0.s8 %v734
        %v737 = vunpack.c.0.s8 %v735
        %v738 = vcvt.s32.f32 %v736
        %v739 = vcvt.s32.f32 %v737
        %vm740 = vcmp.gt.f32.partialorder %v738, 0.0
        %vm741 = vcmp.gt.f32.partialorder %v739, 0.0
        %v742 = vsel %vm740, %v731, -9e+15
        %v743 = vsel %vm741, %v732, -9e+15
        %v744 = vsel %vm445, %v742, -inf
        %745 = vmax.xlane.f32.xlu0 %v744
        %v746 = vpop.xlane.xlu0 %745
        %v747 = vsel %vm445, %v743, -inf
        %748 = vmax.xlane.f32.xlu0 %v747
        %v749 = vpop.xlane.xlu0 %748
        %v750 = vsub.f32 %v742, %v746
        %v751 = vsub.f32 %v743, %v749
        %v752 = vmul.f32 %v750, 1.442695
        %v753 = vpow.pop %v752
        %v754 = vmul.f32 %v751, 1.442695
        %v755 = vpow.pop %v754
        %v756 = vsel %vm445, %v753, 0.0
        %757 = vadd.xlane.f32.xlu0 %v756
        %v758 = vpop.xlane.xlu0 %757
        %v759 = vsel %vm445, %v755, 0.0
        %760 = vadd.xlane.f32.xlu0 %v759
        %v761 = vpop.xlane.xlu0 %760
        %v763 = vsel %vm445, %v753, 0
        %v766 = vsel %vm445, %v755, 0
        %768 = vmatprep.subr.mxu0 0.0
        %769 = vmatpush1.msra.mxu0 %v637
        %770 = vmatprep.subr.mxu0 0.0
        %771 = vmatpush1.msra.mxu0 %v642
        %772 = vmatprep.subr.mxu0 0.0
        %773 = vmatpush1.msra.mxu0 0.0
        %774 = vmatprep.subr.mxu0 0.0
        %775 = vmatpush1.msra.mxu0 0.0
        %776 = vmatprep.subr.mxu0 0.0
        %777 = vmatpush1.msra.mxu0 0.0
        %778 = vmatprep.subr.mxu0 0.0
        %779 = vmatpush1.msra.mxu0 0.0
        %780 = vmatprep.subr.mxu0 0.0
        %781 = vmatpush1.msra.mxu0 0.0
        %782 = vmatprep.subr.mxu0 0.0
        %783 = vmatpush1.msra.mxu0 0.0
        %784 = vmatprep.subr.mxu0 0.0
        %785 = vmatpush1.msra.mxu0 0.0
        %786 = vmatprep.subr.mxu0 0.0
        %787 = vmatpush1.msra.mxu0 0.0
        %788 = vmatprep.subr.mxu0 0.0
        %789 = vmatpush1.msra.mxu0 0.0
        %790 = vmatprep.subr.mxu0 0.0
        %791 = vmatpush1.msra.mxu0 0.0
        %792 = vmatprep.subr.mxu0 0.0
        %793 = vmatpush1.msra.mxu0 0.0
        %794 = vmatprep.subr.mxu0 0.0
        %795 = vmatpush1.msra.mxu0 0.0
        %796 = vmatprep.subr.mxu0 0.0
        %797 = vmatpush1.msra.mxu0 0.0
        %798 = vmatprep.subr.mxu0 0.0
        %799 = vmatpush1.msra.mxu0 0.0
        %800 = vmatprep.subr.mxu0 0.0
        %801 = vmatpush1.msra.mxu0 0.0
        %802 = vmatprep.subr.mxu0 0.0
        %803 = vmatpush1.msra.mxu0 0.0
        %804 = vmatprep.subr.mxu0 0.0
        %805 = vmatpush1.msra.mxu0 0.0
        %806 = vmatprep.subr.mxu0 0.0
        %807 = vmatpush1.msra.mxu0 0.0
        %808 = vmatprep.subr.mxu0 0.0
        %809 = vmatpush1.msra.mxu0 0.0
        %810 = vmatprep.subr.mxu0 0.0
        %811 = vmatpush1.msra.mxu0 0.0
        %812 = vmatprep.subr.mxu0 0.0
        %813 = vmatpush1.msra.mxu0 0.0
        %814 = vmatprep.subr.mxu0 0.0
        %815 = vmatpush1.msra.mxu0 0.0
        %816 = vmatprep.subr.mxu0 0.0
        %817 = vmatpush1.msra.mxu0 0.0
        %818 = vmatprep.subr.mxu0 0.0
        %819 = vmatpush1.msra.mxu0 0.0
        %820 = vmatprep.subr.mxu0 0.0
        %821 = vmatpush1.msra.mxu0 0.0
        %822 = vmatprep.subr.mxu0 0.0
        %823 = vmatpush1.msra.mxu0 0.0
        %824 = vmatprep.subr.mxu0 0.0
        %825 = vmatpush1.msra.mxu0 0.0
        %826 = vmatprep.subr.mxu0 0.0
        %827 = vmatpush1.msra.mxu0 0.0
        %828 = vmatprep.subr.mxu0 0.0
        %829 = vmatpush1.msra.mxu0 0.0
        %830 = vmatprep.subr.mxu0 0.0
        %831 = vmatpush1.msra.mxu0 0.0
        %832 = vmatprep.mubr.f32.mxu0 0.0
        %833 = vmatmul.mubr.f32.gmra.mrb[0].mxu0 %v763
        %v834 = vpop.f32.mrb[0].mxu0
        %v835 = vadd.f32 0.0, %v834
        %v836 = vpop.f32.mrb[0].mxu0
        %837 = vmatprep.mubr.f32.mxu0 0.0
        %838 = vmatmul.mubr.f32.gmra.mrb[0].mxu0 %v766
        %v839 = vpop.f32.mrb[0].mxu0
        %v840 = vadd.f32 0.0, %v839
        %v841 = vpop.f32.mrb[0].mxu0
        %842 = vdwg.mxu0
        %v843 = vrcp.pop %v758
        %v844 = vrcp.pop %v761
        %v845 = vmul.f32 %v835, %v843
        %v846 = vmul.f32 %v840, %v844
        %vm847 = vcmp.gt.f32.partialorder %v845, 0.0
        %vm848 = vcmp.gt.f32.partialorder %v846, 0.0
        %v849 = vmul.f32 %v845, 1.442695
        %v850 = vpow.pop %v849
        %v851 = vmul.f32 %v846, 1.442695
        %v852 = vpow.pop %v851
        %v853 = vsub.f32 %v850, 1.0
        %v854 = vsub.f32 %v852, 1.0
        %v855 = vsel %vm847, %v845, %v853
        %v856 = vsel %vm848, %v846, %v854
        %s857 = scalar_lea.vmem %s238, 16 [#allocation2]
        %858 = vst [vmem:[%s857] sm:$0xff] %v855
        %859 = vst [vmem:[%s857 + $0x8] sm:$0xff] %v856
        %s860 = sand.u32 %s142, 1
        %s861 = scalar_lea.sflag [#allocation3], %s860
        %s862 = sand.u32 %s142, 1
        %s863 = smul.addr %s862, 32
        %s864 = scalar_lea.vmem [#allocation2], %s863
        // Predicated region
        $region41: #{tpu_custom_call.1} parent=39 // pred_check
          %p865 = pneg %p152
        $region42: #{tpu_custom_call.1} parent=39 // pred_check_branch
          %867 = sbr.rel (%p865) target = $region44
        $region43: #{tpu_custom_call.1} parent=39 // pred_region
          %s868 = smul.u32 2, %s19
          %s870 = ssub.s32 512, 512
          %871 = vsyncadd %s861, %s870
          %s872 = smul.addr %s868, 2
          %s873 = smul.addr %s872, 128
          %s874 = scalar_lea.hbm %s5, %s873
          %s875 = sshll.u32 %s864, 4
          %s876 = int_to_ptr.vmem [resolvable:$true] %s875
          %881 = dma.vmem_to_hbm [thread:$0]  %s876, 512, %s874, %s861, 128, 128, 8
        $region44: #{tpu_custom_call.1} parent=39 // pred_fallthru
          _
      $region40: #{tpu_custom_call.1} parent=5 // pred_fallthru
        _
      %p882 = scmp.le.s32.totalorder 2, %s14
      // Predicated region
      $region45: #{tpu_custom_call.1} parent=5 // pred_check
        %p883 = pneg %p882
      $region46: #{tpu_custom_call.1} parent=5 // pred_check_branch
        %885 = sbr.rel (%p883) target = $region48
      $region47: #{tpu_custom_call.1} parent=5 // pred_region
        %s886 = ssub.s32 %s14, 2
        // Predicated region
        $region49: #{tpu_custom_call.1} parent=47 // pred_check
          %p887 = pneg %p158
        $region50: #{tpu_custom_call.1} parent=47 // pred_check_branch
          %889 = sbr.rel (%p887) target = $region52
        $region51: #{tpu_custom_call.1} parent=47 // pred_region
          %s890 = sand.u32 %s143, 1
          %s891 = scalar_lea.sflag [#allocation3], %s890
          %s892 = sand.u32 %s143, 1
          %s893 = smul.addr %s892, 32
          %s894 = scalar_lea.vmem [#allocation2], %s893
          %895 = dma.done %s891, 512
        $region52: #{tpu_custom_call.1} parent=47 // pred_fallthru
          _
      $region48: #{tpu_custom_call.1} parent=5 // pred_fallthru
        _
    $region6: #{tpu_custom_call.1} parent=1 // loop_footer
      %s18 = sadd.s32 1, %s14
    $region7: #{tpu_custom_call.1} parent=1 // loop_footer_branch
      %13 = sbr.rel target = $region3
    $region8: #{tpu_custom_call.1} parent=1 // loop_exit
      _
    %896 = vsyncpa [#allocation3], 1
    %s897 = scalar_lea.sflag [#allocation3], 1
    %898 = vsyncpa %s897, 1

</llo_original>
